<compile_context>
chip_gen: v7x
topology: tpu7x:2x2x1
jax: 0.10.0
libtpu: 0.0.40
codegen_flags: <defaults>
</compile_context>

<pallas_src>
import functools

import jax
import jax.numpy as jnp
from jax.experimental import pallas as pl
from jax.experimental.pallas import tpu as pltpu


def _round_up(x, m):
    return ((x + m - 1) // m) * m


# ----------------------------------------------------------------------------
# Pallas kernel: encoder Linear + ReLU, fused (policy|value) head, log-softmax,
# packed lane-dense output.
# ----------------------------------------------------------------------------
def policy_kernel(x_ref, we_ref, be_ref, wh_ref, bh_ref, out_ref, *, num_actions):
    # encoder: Linear + ReLU  (bf16 operands, f32 accumulation)
    x = x_ref[...]                                               # (TB, D)  bf16
    h = jnp.dot(x, we_ref[...], preferred_element_type=jnp.float32)
    h = jnp.maximum(h + be_ref[...], 0.0)                        # (TB, Fp) f32

    # fused policy+value head: ONE matmul (TB, Fp) x (Fp, Np)
    head = jnp.dot(h.astype(jnp.bfloat16), wh_ref[...],
                   preferred_element_type=jnp.float32)
    head = head + bh_ref[...]                                    # (TB, Np) f32
    # columns: [0, A) = policy logits, A = value, [A+1, Np) = padding

    col = jax.lax.broadcasted_iota(jnp.int32, head.shape, 1)
    is_logit = col < num_actions
    is_value = col == num_actions

    # log-softmax over the real logit columns only (padding masked out
    # BEFORE the reductions; value column excluded too).
    neg_big = jnp.float32(-1e30)
    logits = jnp.where(is_logit, head, neg_big)
    m = jnp.max(logits, axis=-1, keepdims=True)
    shifted = logits - m
    lse = jnp.log(jnp.sum(jnp.exp(shifted), axis=-1, keepdims=True))
    logp = shifted - lse

    # packed lane-dense output: log-probs | value | zeros
    out_ref[...] = jnp.where(is_logit, logp,
                             jnp.where(is_value, head, 0.0))


# ----------------------------------------------------------------------------
# Wrapper
# ----------------------------------------------------------------------------
def policy_forward(x, packed, *, block_b=512):
    """Returns (log_probs, value) matching Policy.forward semantics."""
    we, be, wh, bh, A = packed["we"], packed["be"], packed["wh"], packed["bh"], packed["A"]
    B, D = x.shape
    Fp = we.shape[1]
    Np = wh.shape[1]

    # batch tile: multiple of 8 sublanes, capped at block_b; pad B up to it.
    TB = min(block_b, _round_up(B, 8))
    Bp = _round_up(B, TB)
    xb = x.astype(jnp.bfloat16)
    if Bp != B:
        xb = jnp.pad(xb, ((0, Bp - B), (0, 0)))
    grid = (Bp // TB,)

    cost = pl.CostEstimate(
        flops=2 * Bp * (D * Fp + Fp * Np),
        transcendentals=Bp * (Np + 1),
        bytes_accessed=(xb.size * 2 + we.size * 2 + be.size * 4
                        + wh.size * 2 + bh.size * 4 + Bp * Np * 4),
    )

    out = pl.pallas_call(
        functools.partial(policy_kernel, num_actions=A),
        out_shape=jax.ShapeDtypeStruct((Bp, Np), jnp.float32),
        grid_spec=pltpu.PrefetchScalarGridSpec(
            num_scalar_prefetch=0,
            grid=grid,
            in_specs=[
                pl.BlockSpec((TB, D), lambda i: (i, 0)),     # x: streamed by batch tile
                pl.BlockSpec((D, Fp), lambda i: (0, 0)),     # weights: VMEM-resident
                pl.BlockSpec((1, Fp), lambda i: (0, 0)),
                pl.BlockSpec((Fp, Np), lambda i: (0, 0)),
                pl.BlockSpec((1, Np), lambda i: (0, 0)),
            ],
            out_specs=pl.BlockSpec((TB, Np), lambda i: (i, 0)),
        ),
        compiler_params=pltpu.CompilerParams(
            dimension_semantics=("parallel",),               # v7x: 2 TCs split batch
            vmem_limit_bytes=32 * 1024 * 1024,               # safe on 64 MiB v7x VMEM
        ),
        cost_estimate=cost,
    )(xb, we, be, wh, bh)

    out = out[:B]
    log_probs = out[:, :A]
    value = out[:, A]            # .squeeze(1) of the value head
    return log_probs, value


# ----------------------------------------------------------------------------
# Deterministic parameter construction (orthogonal init, zero bias)
# ----------------------------------------------------------------------------
def orthogonal(key, shape, gain):
    # shape = (fan_in, fan_out); returns an orthogonal matrix scaled by gain
    a = jax.random.normal(key, shape, dtype=jnp.float32)
    q, r = jnp.linalg.qr(a if shape[0] >= shape[1] else a.T)
    q = q * jnp.sign(jnp.diagonal(r))[None, :]
    if shape[0] < shape[1]:
        q = q.T
    return gain * q[: shape[0], : shape[1]]


def make_params(key, in_dim, feature_dim, num_actions):
    k0, k1, k2 = jax.random.split(key, 3)
    return {
        # stored transposed for right-multiplication: y = x @ W + b
        "we": orthogonal(k0, (in_dim, feature_dim), gain=jnp.sqrt(2.0)),
        "be": jnp.zeros((1, feature_dim), jnp.float32),
        "wp": orthogonal(k1, (feature_dim, num_actions), gain=0.01),
        "bp": jnp.zeros((1, num_actions), jnp.float32),
        "wv": orthogonal(k2, (feature_dim, 1), gain=1.0),
        "bv": jnp.zeros((1, 1), jnp.float32),
    }


def pack_params(p):
    """Pad feature dim, fuse (wp|wv) -> one head matrix, cast matmul operands
    to bf16. Kernel-ready parameter dict."""
    D, F = p["we"].shape
    A = p["wp"].shape[1]
    Fp = _round_up(F, 128)          # MXU/lane-friendly contraction width
    Np = _round_up(A + 1, 128)      # lane-dense packed output width

    we = jnp.zeros((D, Fp), jnp.float32).at[:, :F].set(p["we"])
    be = jnp.zeros((1, Fp), jnp.float32).at[:, :F].set(p["be"])

    wh = jnp.zeros((Fp, Np), jnp.float32)
    wh = wh.at[:F, :A].set(p["wp"]).at[:F, A].set(p["wv"][:, 0])
    bh = jnp.zeros((1, Np), jnp.float32)
    bh = bh.at[:, :A].set(p["bp"]).at[:, A].set(p["bv"][:, 0])

    return {
        "we": we.astype(jnp.bfloat16),
        "be": be,                      # biases / reductions stay f32
        "wh": wh.astype(jnp.bfloat16),
        "bh": bh,
        "A": A,
    }


# ----------------------------------------------------------------------------
# Reference (pure JAX, f32) for a sanity check
# ----------------------------------------------------------------------------
def reference_forward(x, p):
    h = jnp.maximum(x @ p["we"] + p["be"], 0.0)
    logits = h @ p["wp"] + p["bp"]
    value = (h @ p["wv"] + p["bv"])[:, 0]
    log_probs = jax.nn.log_softmax(logits, axis=-1)
    return log_probs, value


if __name__ == "__main__":
    batch, in_dim, feature_dim, num_actions = 8, 32, 32, 16

    key = jax.random.PRNGKey(0)
    kx, kp = jax.random.split(key)
    x = jax.random.normal(kx, (batch, in_dim), dtype=jnp.float32)
    params = make_params(kp, in_dim, feature_dim, num_actions)
    packed = pack_params(params)

    log_probs, value = policy_forward(x, packed)
    jax.block_until_ready((log_probs, value))

    # f32 reference; tolerances loosened for bf16 matmul operands.
    ref_lp, ref_v = reference_forward(x, params)
    assert log_probs.shape == (batch, num_actions)
    assert value.shape == (batch,)
    assert jnp.allclose(log_probs, ref_lp, atol=5e-2, rtol=5e-2)
    assert jnp.allclose(value, ref_v, atol=5e-2, rtol=5e-2)
    # log-probs must be normalized
    assert jnp.allclose(jnp.sum(jnp.exp(log_probs), axis=-1), 1.0, atol=1e-3)

    # TODO(synk): dist.sample()/log_prob from Policy.act() (stochastic sampling)
    # is host-side glue over these log-probs and is not part of the kernel.
    print("KERNEL_OK")
</pallas_src>

<mosaic_0001>
module attributes {stable_mosaic.version = 11 : i64} {
  func.func @policy_kernel(%arg0: i32, %arg1: memref<8x32xbf16, #tpu.memory_space<vmem>>, %arg2: memref<32x128xbf16, #tpu.memory_space<vmem>>, %arg3: memref<1x128xf32, #tpu.memory_space<vmem>>, %arg4: memref<128x128xbf16, #tpu.memory_space<vmem>>, %arg5: memref<1x128xf32, #tpu.memory_space<vmem>>, %arg6: memref<8x128xf32, #tpu.memory_space<vmem>>) attributes {dimension_semantics = [#tpu.dimension_semantics<parallel>], iteration_bounds = array<i64: 1>, scalar_prefetch = 0 : i64, scratch_operands = 0 : i64, tpu.core_type = #tpu.core_type<tc>, window_params = [{transform_indices = @transform_0, window_bounds = array<i64: 8, 32>}, {pipeline_mode = #tpu.pipeline_mode<synchronous>, transform_indices = @transform_1, window_bounds = array<i64: 32, 128>}, {pipeline_mode = #tpu.pipeline_mode<synchronous>, transform_indices = @transform_2, window_bounds = array<i64: 1, 128>}, {pipeline_mode = #tpu.pipeline_mode<synchronous>, transform_indices = @transform_3, window_bounds = array<i64: 128, 128>}, {pipeline_mode = #tpu.pipeline_mode<synchronous>, transform_indices = @transform_4, window_bounds = array<i64: 1, 128>}, {transform_indices = @transform_5, window_bounds = array<i64: 8, 128>}]} {
    %c0 = arith.constant 0 : index
    %c0_0 = arith.constant 0 : index
    %0 = vector.load %arg1[%c0, %c0_0] : memref<8x32xbf16, #tpu.memory_space<vmem>>, vector<8x32xbf16>
    %c0_1 = arith.constant 0 : index
    %c0_2 = arith.constant 0 : index
    %1 = vector.load %arg2[%c0_1, %c0_2] : memref<32x128xbf16, #tpu.memory_space<vmem>>, vector<32x128xbf16>
    %cst = arith.constant dense<0.000000e+00> : vector<8x128xf32>
    %2 = tpu.matmul %0, %1, %cst {dimension_numbers = #tpu.dot_dimension_numbers<[1], [0], [0], [1], [0, 0, 1, 1], [], []>} : vector<8x32xbf16>, vector<32x128xbf16>, vector<8x128xf32> -> vector<8x128xf32>
    %c0_3 = arith.constant 0 : index
    %c0_4 = arith.constant 0 : index
    %3 = vector.load %arg3[%c0_3, %c0_4] : memref<1x128xf32, #tpu.memory_space<vmem>>, vector<1x128xf32>
    %4 = vector.broadcast %3 : vector<1x128xf32> to vector<8x128xf32>
    %5 = arith.addf %2, %4 : vector<8x128xf32>
    %cst_5 = arith.constant 0.000000e+00 : f32
    %6 = vector.broadcast %cst_5 : f32 to vector<8x128xf32>
    %7 = arith.maximumf %5, %6 : vector<8x128xf32>
    %8 = arith.truncf %7 : vector<8x128xf32> to vector<8x128xbf16>
    %c0_6 = arith.constant 0 : index
    %c0_7 = arith.constant 0 : index
    %9 = vector.load %arg4[%c0_6, %c0_7] : memref<128x128xbf16, #tpu.memory_space<vmem>>, vector<128x128xbf16>
    %cst_8 = arith.constant dense<0.000000e+00> : vector<8x128xf32>
    %10 = tpu.matmul %8, %9, %cst_8 {dimension_numbers = #tpu.dot_dimension_numbers<[1], [0], [0], [1], [0, 0, 1, 1], [], []>} : vector<8x128xbf16>, vector<128x128xbf16>, vector<8x128xf32> -> vector<8x128xf32>
    %c0_9 = arith.constant 0 : index
    %c0_10 = arith.constant 0 : index
    %11 = vector.load %arg5[%c0_9, %c0_10] : memref<1x128xf32, #tpu.memory_space<vmem>>, vector<1x128xf32>
    %12 = vector.broadcast %11 : vector<1x128xf32> to vector<8x128xf32>
    %13 = arith.addf %10, %12 : vector<8x128xf32>
    %14 = tpu.iota {dimensions = array<i32: 1>} : vector<8x128xi32>
    %c16_i32 = arith.constant 16 : i32
    %15 = vector.broadcast %c16_i32 : i32 to vector<8x128xi32>
    %16 = arith.cmpi slt, %14, %15 : vector<8x128xi32>
    %c16_i32_11 = arith.constant 16 : i32
    %17 = vector.broadcast %c16_i32_11 : i32 to vector<8x128xi32>
    %18 = arith.cmpi eq, %14, %17 : vector<8x128xi32>
    %cst_12 = arith.constant -1.000000e+30 : f32
    %19 = vector.broadcast %cst_12 : f32 to vector<8x128xf32>
    %20 = arith.select %16, %13, %19 : vector<8x128xi1>, vector<8x128xf32>
    %cst_13 = arith.constant dense<0xFF800000> : vector<8xf32>
    %21 = vector.multi_reduction <maximumf>, %20, %cst_13 [1] : vector<8x128xf32> to vector<8xf32>
    %22 = vector.shape_cast %21 : vector<8xf32> to vector<8x1xf32>
    %23 = vector.broadcast %22 : vector<8x1xf32> to vector<8x128xf32>
    %24 = arith.subf %20, %23 : vector<8x128xf32>
    %25 = math.exp %24 : vector<8x128xf32>
    %cst_14 = arith.constant dense<0.000000e+00> : vector<8xf32>
    %26 = vector.multi_reduction <add>, %25, %cst_14 [1] : vector<8x128xf32> to vector<8xf32>
    %27 = vector.shape_cast %26 : vector<8xf32> to vector<8x1xf32>
    %28 = math.log %27 : vector<8x1xf32>
    %29 = vector.broadcast %28 : vector<8x1xf32> to vector<8x128xf32>
    %30 = arith.subf %24, %29 : vector<8x128xf32>
    %cst_15 = arith.constant 0.000000e+00 : f32
    %31 = vector.broadcast %cst_15 : f32 to vector<8x128xf32>
    %32 = arith.select %18, %13, %31 : vector<8x128xi1>, vector<8x128xf32>
    %33 = arith.select %16, %30, %32 : vector<8x128xi1>, vector<8x128xf32>
    %c0_16 = arith.constant 0 : index
    %c0_17 = arith.constant 0 : index
    %34 = vector.load %arg6[%c0_16, %c0_17] : memref<8x128xf32, #tpu.memory_space<vmem>>, vector<8x128xf32>
    tpu.vector_store %arg6[%c0_16, %c0_17], %33 {strides = array<i32>} : memref<8x128xf32, #tpu.memory_space<vmem>>, vector<8x128xf32>,
    return
  }
  func.func @transform_0(%arg0: i32) -> (i32, i32) {
    %c0_i32 = arith.constant 0 : i32
    %c0_i32_0 = arith.constant 0 : i32
    return %arg0, %c0_i32 : i32, i32
  }
  func.func @transform_1(%arg0: i32) -> (i32, i32) {
    %c0_i32 = arith.constant 0 : i32
    %c0_i32_0 = arith.constant 0 : i32
    %c0_i32_1 = arith.constant 0 : i32
    return %c0_i32, %c0_i32_0 : i32, i32
  }
  func.func @transform_2(%arg0: i32) -> (i32, i32) {
    %c0_i32 = arith.constant 0 : i32
    %c0_i32_0 = arith.constant 0 : i32
    %c0_i32_1 = arith.constant 0 : i32
    return %c0_i32, %c0_i32_0 : i32, i32
  }
  func.func @transform_3(%arg0: i32) -> (i32, i32) {
    %c0_i32 = arith.constant 0 : i32
    %c0_i32_0 = arith.constant 0 : i32
    %c0_i32_1 = arith.constant 0 : i32
    return %c0_i32, %c0_i32_0 : i32, i32
  }
  func.func @transform_4(%arg0: i32) -> (i32, i32) {
    %c0_i32 = arith.constant 0 : i32
    %c0_i32_0 = arith.constant 0 : i32
    %c0_i32_1 = arith.constant 0 : i32
    return %c0_i32, %c0_i32_0 : i32, i32
  }
  func.func @transform_5(%arg0: i32) -> (i32, i32) {
    %c0_i32 = arith.constant 0 : i32
    %c0_i32_0 = arith.constant 0 : i32
    return %arg0, %c0_i32 : i32, i32
  }
}

</mosaic_0001>

<llo_original>
// kernel: tpu_custom_call.1
$region0: #{tpu_custom_call.1}
  #allocation0 [shape = 'u32[]', space=smem, size = 0x4, offset = 0x4, fixed_abs, tag = 'smem constant byte address 0x4 - core index']
  #allocation1 [shape = 'u32[144,128]{1,0:T(1,128)}', space=vmem, size = 0x12000, scoped, tag = 'internal scratch']
  %s0 = inlined_call_operand.hbm [shape: bf16[8,32], index: 0, kind: input, shape index: {}]
  %s1 = inlined_call_operand.hbm [shape: bf16[32,128], index: 1, kind: input, shape index: {}]
  %s2 = inlined_call_operand.vmem [shape: f32[1,128], index: 2, kind: input, shape index: {}]
  %s3 = inlined_call_operand.hbm [shape: bf16[128,128], index: 3, kind: input, shape index: {}]
  %s4 = inlined_call_operand.vmem [shape: f32[1,128], index: 4, kind: input, shape index: {}]
  %s5 = inlined_call_operand.hbm [shape: f32[8,128], index: 5, kind: output, shape index: {}]
  %s6 = sld [smem:[#allocation0]]
  $region42: #{tpu_custom_call.1} parent=0
    _
  %s8 = ssub.s32 1, %s6
  %s9 = scalar_select 0, %s8, %s6
  $region1: #{tpu_custom_call.1} parent=0
    #allocation2 [shape = 'u8[2048]{0}', space=vmem, size = 0x800, scoped, tag = 'input window, operand 0, single buffered']
    #allocation3 [shape = 's32[1]{0}', space=sflag, size = 0x4, scoped, tag = 'scoped memory for tpu_custom_call.1']
    #allocation4 [shape = 's32[1]{0}', space=sflag, size = 0x4, scoped, tag = 'scoped memory for tpu_custom_call.1']
    #allocation5 [shape = 'u8[8192]{0}', space=vmem, size = 0x2000, scoped, tag = 'input window, operand 1, single buffered']
    #allocation6 [shape = 's32[1]{0}', space=sflag, size = 0x4, scoped, tag = 'scoped memory for tpu_custom_call.1']
    #allocation7 [shape = 'u8[32768]{0}', space=vmem, size = 0x8000, scoped, tag = 'input window, operand 3, single buffered']
    #allocation8 [shape = 'u8[4096]{0}', space=vmem, size = 0x1000, scoped, tag = 'output window, operand 0, single buffered']
    %10 = vsyncpa [#allocation3], 0
    %11 = vsyncpa [#allocation6], 0
    %12 = vsyncpa [#allocation4], 0
    // Predicated region
    $region2: #{tpu_custom_call.1} parent=1 // pred_check
      _
    $region3: #{tpu_custom_call.1} parent=1 // pred_check_branch
      %14 = sbr.rel (0) target = $region5
    $region4: #{tpu_custom_call.1} parent=1 // pred_region
      %s16 = ssub.s32 64, 64
      %17 = vsyncadd [#allocation3], %s16
      %s19 = sshll.u32 [#allocation2], 4
      %s20 = int_to_ptr.vmem [resolvable:$true] %s19
      %22 = dma.hbm_to_vmem [thread:$0]  %s0, 64, %s20, [#allocation3]
    $region5: #{tpu_custom_call.1} parent=1 // pred_fallthru
      _
    // Predicated region
    $region6: #{tpu_custom_call.1} parent=1 // pred_check
      _
    $region7: #{tpu_custom_call.1} parent=1 // pred_check_branch
      %24 = sbr.rel (0) target = $region9
    $region8: #{tpu_custom_call.1} parent=1 // pred_region
      %s26 = ssub.s32 256, 256
      %27 = vsyncadd [#allocation6], %s26
      %s28 = sshll.u32 [#allocation5], 4
      %s29 = int_to_ptr.vmem [resolvable:$true] %s28
      %34 = dma.hbm_to_vmem [thread:$0]  %s1, 256, %s29, [#allocation6], 64, 64, 4
    $region9: #{tpu_custom_call.1} parent=1 // pred_fallthru
      _
    // Predicated region
    $region10: #{tpu_custom_call.1} parent=1 // pred_check
      _
    $region11: #{tpu_custom_call.1} parent=1 // pred_check_branch
      %36 = sbr.rel (0) target = $region13
    $region12: #{tpu_custom_call.1} parent=1 // pred_region
      _
    $region13: #{tpu_custom_call.1} parent=1 // pred_fallthru
      _
    // Predicated region
    $region14: #{tpu_custom_call.1} parent=1 // pred_check
      _
    $region15: #{tpu_custom_call.1} parent=1 // pred_check_branch
      %38 = sbr.rel (0) target = $region17
    $region16: #{tpu_custom_call.1} parent=1 // pred_region
      %s40 = ssub.s32 1024, 1024
      %41 = vsyncadd [#allocation6], %s40
      %s42 = sshll.u32 [#allocation7], 4
      %s43 = int_to_ptr.vmem [resolvable:$true] %s42
      %48 = dma.hbm_to_vmem [thread:$0]  %s3, 1024, %s43, [#allocation6], 64, 64, 4
    $region17: #{tpu_custom_call.1} parent=1 // pred_fallthru
      _
    // Predicated region
    $region18: #{tpu_custom_call.1} parent=1 // pred_check
      _
    $region19: #{tpu_custom_call.1} parent=1 // pred_check_branch
      %50 = sbr.rel (0) target = $region21
    $region20: #{tpu_custom_call.1} parent=1 // pred_region
      _
    $region21: #{tpu_custom_call.1} parent=1 // pred_fallthru
      _
    // Predicated region
    $region22: #{tpu_custom_call.1} parent=1 // pred_check
      _
    $region23: #{tpu_custom_call.1} parent=1 // pred_check_branch
      %52 = sbr.rel (0) target = $region25
    $region24: #{tpu_custom_call.1} parent=1 // pred_region
      %53 = dma.done [#allocation3], 64
    $region25: #{tpu_custom_call.1} parent=1 // pred_fallthru
      _
    // Predicated region
    $region26: #{tpu_custom_call.1} parent=1 // pred_check
      _
    $region27: #{tpu_custom_call.1} parent=1 // pred_check_branch
      %55 = sbr.rel (0) target = $region29
    $region28: #{tpu_custom_call.1} parent=1 // pred_region
      %56 = dma.done [#allocation6], 256
    $region29: #{tpu_custom_call.1} parent=1 // pred_fallthru
      _
    // Predicated region
    $region30: #{tpu_custom_call.1} parent=1 // pred_check
      _
    $region31: #{tpu_custom_call.1} parent=1 // pred_check_branch
      %58 = sbr.rel (0) target = $region33
    $region32: #{tpu_custom_call.1} parent=1 // pred_region
      %59 = dma.done [#allocation6], 1024
    $region33: #{tpu_custom_call.1} parent=1 // pred_fallthru
      _
    %v61 = vld [vmem:[#allocation2] sm:$0xf]
    %v62 = vld [vmem:[#allocation5] sm:$0xf]
    %v63 = vld [vmem:[#allocation5 + $0x4] sm:$0xf]
    %v64 = vld [vmem:[#allocation5 + $0x8] sm:$0xf]
    %v65 = vld [vmem:[#allocation5 + $0xc] sm:$0xf]
    %v66 = vld [vmem:[%s2] sm:$0x1]
    %v68 = vlaneseq
    %v69 = vshrl.u32 %v68, 7
    %v70 = vsub.s32 0, %v69
    %v71 = vrot.slane %v66, %v70
    %v77 = vunpack.c.l.b16 %v62
    %v78 = vunpack.c.l.b16 %v63
    %v79 = vunpack.c.l.b16 %v64
    %v80 = vunpack.c.l.b16 %v65
    %v81 = vpack.c.b16 %v78, %v77
    %v82 = vpack.c.b16 %v80, %v79
    %vm85 = vcmask 261120
    %v87 = vsel %vm85, %v61, 0
    %89 = vmatprep.subr.bf16.mxu0 0
    %90 = vmatpush1.bf16.msra.mxu0 %v81
    %91 = vmatprep.subr.bf16.mxu0 0
    %92 = vmatpush1.bf16.msra.mxu0 %v82
    %93 = vmatprep.subr.bf16.mxu0 0
    %94 = vmatpush1.bf16.msra.mxu0 0
    %95 = vmatprep.subr.bf16.mxu0 0
    %96 = vmatpush1.bf16.msra.mxu0 0
    %97 = vmatprep.subr.bf16.mxu0 0
    %98 = vmatpush1.bf16.msra.mxu0 0
    %99 = vmatprep.subr.bf16.mxu0 0
    %100 = vmatpush1.bf16.msra.mxu0 0
    %101 = vmatprep.subr.bf16.mxu0 0
    %102 = vmatpush1.bf16.msra.mxu0 0
    %103 = vmatprep.subr.bf16.mxu0 0
    %104 = vmatpush1.bf16.msra.mxu0 0
    %105 = vmatprep.subr.bf16.mxu0 0
    %106 = vmatpush1.bf16.msra.mxu0 0
    %107 = vmatprep.subr.bf16.mxu0 0
    %108 = vmatpush1.bf16.msra.mxu0 0
    %109 = vmatprep.subr.bf16.mxu0 0
    %110 = vmatpush1.bf16.msra.mxu0 0
    %111 = vmatprep.subr.bf16.mxu0 0
    %112 = vmatpush1.bf16.msra.mxu0 0
    %113 = vmatprep.subr.bf16.mxu0 0
    %114 = vmatpush1.bf16.msra.mxu0 0
    %115 = vmatprep.subr.bf16.mxu0 0
    %116 = vmatpush1.bf16.msra.mxu0 0
    %117 = vmatprep.subr.bf16.mxu0 0
    %118 = vmatpush1.bf16.msra.mxu0 0
    %119 = vmatprep.subr.bf16.mxu0 0
    %120 = vmatpush1.bf16.msra.mxu0 0
    %121 = vmatprep.mubr.bf16.mxu0 0
    %122 = vmatmul.mubr.bf16.gmra.mrb[0].mxu0 %v87
    %v123 = vpop.f32.mrb[0].mxu0
    %v124 = vadd.f32 %v71, %v123
    %v125 = vpop.f32.mrb[0].mxu0
    %v126 = vpop.f32.mrb[0].mxu0
    %v127 = vpop.f32.mrb[0].mxu0
    %128 = vdwg.mxu0
    %v129 = vmax.f32 %v124, 0.0
    %v130 = vpack.c.bf16 %v129, %v129
    %v131 = vld [vmem:[#allocation7] sm:$0xf]
    %v132 = vld [vmem:[#allocation7 + $0x4] sm:$0xf]
    %v133 = vld [vmem:[#allocation7 + $0x8] sm:$0xf]
    %v134 = vld [vmem:[#allocation7 + $0xc] sm:$0xf]
    %v135 = vld [vmem:[#allocation7 + $0x10] sm:$0xf]
    %v136 = vld [vmem:[#allocation7 + $0x14] sm:$0xf]
    %v137 = vld [vmem:[#allocation7 + $0x18] sm:$0xf]
    %v138 = vld [vmem:[#allocation7 + $0x1c] sm:$0xf]
    %v139 = vld [vmem:[#allocation7 + $0x20] sm:$0xf]
    %v140 = vld [vmem:[#allocation7 + $0x24] sm:$0xf]
    %v141 = vld [vmem:[#allocation7 + $0x28] sm:$0xf]
    %v142 = vld [vmem:[#allocation7 + $0x2c] sm:$0xf]
    %v143 = vld [vmem:[#allocation7 + $0x30] sm:$0xf]
    %v144 = vld [vmem:[#allocation7 + $0x34] sm:$0xf]
    %v145 = vld [vmem:[#allocation7 + $0x38] sm:$0xf]
    %v146 = vld [vmem:[#allocation7 + $0x3c] sm:$0xf]
    %v147 = vld [vmem:[%s4] sm:$0x1]
    %v149 = vlaneseq
    %v150 = vshrl.u32 %v149, 7
    %v151 = vsub.s32 0, %v150
    %v152 = vrot.slane %v147, %v151
    %v170 = vunpack.c.l.b16 %v131
    %v171 = vunpack.c.l.b16 %v132
    %v172 = vunpack.c.l.b16 %v133
    %v173 = vunpack.c.l.b16 %v134
    %v174 = vunpack.c.l.b16 %v135
    %v175 = vunpack.c.l.b16 %v136
    %v176 = vunpack.c.l.b16 %v137
    %v177 = vunpack.c.l.b16 %v138
    %v178 = vunpack.c.l.b16 %v139
    %v179 = vunpack.c.l.b16 %v140
    %v180 = vunpack.c.l.b16 %v141
    %v181 = vunpack.c.l.b16 %v142
    %v182 = vunpack.c.l.b16 %v143
    %v183 = vunpack.c.l.b16 %v144
    %v184 = vunpack.c.l.b16 %v145
    %v185 = vunpack.c.l.b16 %v146
    %v186 = vpack.c.b16 %v171, %v170
    %v187 = vpack.c.b16 %v173, %v172
    %v188 = vpack.c.b16 %v175, %v174
    %v189 = vpack.c.b16 %v177, %v176
    %v190 = vpack.c.b16 %v179, %v178
    %v191 = vpack.c.b16 %v181, %v180
    %v192 = vpack.c.b16 %v183, %v182
    %v193 = vpack.c.b16 %v185, %v184
    %202 = vmatprep.subr.bf16.mxu0 0
    %203 = vmatpush1.bf16.msra.mxu0 %v186
    %204 = vmatprep.subr.bf16.mxu0 0
    %205 = vmatpush1.bf16.msra.mxu0 %v187
    %206 = vmatprep.subr.bf16.mxu0 0
    %207 = vmatpush1.bf16.msra.mxu0 %v188
    %208 = vmatprep.subr.bf16.mxu0 0
    %209 = vmatpush1.bf16.msra.mxu0 %v189
    %210 = vmatprep.subr.bf16.mxu0 0
    %211 = vmatpush1.bf16.msra.mxu0 %v190
    %212 = vmatprep.subr.bf16.mxu0 0
    %213 = vmatpush1.bf16.msra.mxu0 %v191
    %214 = vmatprep.subr.bf16.mxu0 0
    %215 = vmatpush1.bf16.msra.mxu0 %v192
    %216 = vmatprep.subr.bf16.mxu0 0
    %217 = vmatpush1.bf16.msra.mxu0 %v193
    %218 = vmatprep.subr.bf16.mxu0 0
    %219 = vmatpush1.bf16.msra.mxu0 0
    %220 = vmatprep.subr.bf16.mxu0 0
    %221 = vmatpush1.bf16.msra.mxu0 0
    %222 = vmatprep.subr.bf16.mxu0 0
    %223 = vmatpush1.bf16.msra.mxu0 0
    %224 = vmatprep.subr.bf16.mxu0 0
    %225 = vmatpush1.bf16.msra.mxu0 0
    %226 = vmatprep.subr.bf16.mxu0 0
    %227 = vmatpush1.bf16.msra.mxu0 0
    %228 = vmatprep.subr.bf16.mxu0 0
    %229 = vmatpush1.bf16.msra.mxu0 0
    %230 = vmatprep.subr.bf16.mxu0 0
    %231 = vmatpush1.bf16.msra.mxu0 0
    %232 = vmatprep.subr.bf16.mxu0 0
    %233 = vmatpush1.bf16.msra.mxu0 0
    %234 = vmatprep.mubr.bf16.mxu0 0
    %235 = vmatmul.mubr.bf16.gmra.mrb[0].mxu0 %v130
    %v236 = vpop.f32.mrb[0].mxu0
    %v237 = vadd.f32 %v152, %v236
    %v238 = vpop.f32.mrb[0].mxu0
    %v239 = vpop.f32.mrb[0].mxu0
    %v240 = vpop.f32.mrb[0].mxu0
    %241 = vdwg.mxu0
    %v242 = vlaneseq
    %v243 = vand.u32 %v242, 127
    %vm244 = vcmp.lt.s32.totalorder %v243, 16
    %vm245 = vcmp.eq.s32.totalorder %v243, 16
    %v246 = vsel %vm244, %v237, -1e+30
    %247 = vmax.xlane.f32.xlu0 %v246
    %v248 = vpop.xlane.xlu0 %247
    %v249 = vsub.f32 %v246, %v248
    %v250 = vmul.f32 %v249, 1.442695
    %v251 = vpow.pop %v250
    %252 = vadd.xlane.f32.xlu0 %v251
    %v253 = vpop.xlane.xlu0 %252
    %v254 = vlog2.pop %v253
    %v255 = vmul.f32 %v254, 0.6931472
    %v256 = vsub.f32 %v249, %v255
    %v257 = vsel %vm245, %v237, 0.0
    %v258 = vsel %vm244, %v256, %v257
    %259 = vst [vmem:[#allocation8] sm:$0xff] %v258
    // Predicated region
    $region34: #{tpu_custom_call.1} parent=1 // pred_check
      _
    $region35: #{tpu_custom_call.1} parent=1 // pred_check_branch
      %261 = sbr.rel (0) target = $region37
    $region36: #{tpu_custom_call.1} parent=1 // pred_region
      %s263 = ssub.s32 128, 128
      %264 = vsyncadd [#allocation4], %s263
      %s266 = sshll.u32 [#allocation8], 4
      %s267 = int_to_ptr.vmem [resolvable:$true] %s266
      %269 = dma.vmem_to_hbm [thread:$0]  %s267, 128, %s5, [#allocation4]
    $region37: #{tpu_custom_call.1} parent=1 // pred_fallthru
      _
    // Predicated region
    $region38: #{tpu_custom_call.1} parent=1 // pred_check
      _
    $region39: #{tpu_custom_call.1} parent=1 // pred_check_branch
      %271 = sbr.rel (0) target = $region41
    $region40: #{tpu_custom_call.1} parent=1 // pred_region
      %272 = dma.done [#allocation4], 128
    $region41: #{tpu_custom_call.1} parent=1 // pred_fallthru
      _
    %273 = vsyncpa [#allocation3], 1
    %274 = vsyncpa [#allocation6], 1
    %275 = vsyncpa [#allocation4], 1

</llo_original>
